<compile_context>
chip_gen: v7x
topology: tpu7x:2x2x1
jax: 0.10.0
libtpu: 0.0.40
codegen_flags: <defaults>
</compile_context>

<pallas_src>
import functools
import math

import jax
import jax.numpy as jnp
from jax.experimental import pallas as pl
from jax.experimental.pallas import tpu as pltpu


def _round_up(x, m):
    return ((x + m - 1) // m) * m


# ----------------------------------------------------------------------------
# Pallas kernel 1: per-level logit thresholding + dense box decode
#   cls logits (N, C, K), regression (N, 4, K), anchors (4, K): anchor axis K
#   on lanes everywhere, K tiled with TK (multiple of 128, or == K).
# ----------------------------------------------------------------------------
def _retina_level_kernel(cls_ref, reg_ref, anc_ref, scores_ref, boxes_ref, *,
                         logit_thresh, bbox_xform_clip, weights,
                         im_w, im_h, true_k, tile_k, mask_tail):
    # --- thresholded logits (monotone stand-in for sigmoid scores) ----------
    logits = cls_ref[0].astype(jnp.float32)                 # (C, TK)
    passed = logits > logit_thresh
    if mask_tail:
        col = (pl.program_id(1) * tile_k
               + jax.lax.broadcasted_iota(jnp.int32, (1, tile_k), 1))
        in_range = col < true_k                             # (1, TK)
        passed = jnp.logical_and(passed, in_range)
    scores_ref[0] = jnp.where(passed, logits, -jnp.inf).astype(scores_ref.dtype)

    # --- box decode (stacked (2, TK) math) -----------------------------------
    anc = anc_ref[...].astype(jnp.float32)                  # (4, TK) xyxy
    reg = reg_ref[0].astype(jnp.float32)                    # (4, TK)
    if mask_tail:
        anc = jnp.where(in_range, anc, 0.0)
        reg = jnp.where(in_range, reg, 0.0)

    wx, wy, ww, wh = weights
    xy1a = anc[0:2]                                         # (2, TK)
    xy2a = anc[2:4]
    sizes = xy2a - xy1a + 1.0                               # TO_REMOVE = 1
    ctrs = xy1a + 0.5 * sizes

    if wx == wy:
        d_xy = reg[0:2] * (1.0 / wx)
    else:
        d_xy = reg[0:2] * jnp.array([[1.0 / wx], [1.0 / wy]], jnp.float32)
    if ww == wh:
        d_wh = reg[2:4] * (1.0 / ww)
    else:
        d_wh = reg[2:4] * jnp.array([[1.0 / ww], [1.0 / wh]], jnp.float32)
    d_wh = jnp.minimum(d_wh, bbox_xform_clip)

    pred_ctr = d_xy * sizes + ctrs
    pred_sz = jnp.exp(d_wh) * sizes

    p1 = pred_ctr - 0.5 * pred_sz                           # (2, TK) [x1; y1]
    p2 = pred_ctr + 0.5 * pred_sz - 1.0                     # (2, TK) [x2; y2]

    # clip_to_image (remove_empty=False)
    if im_w == im_h:
        hi = im_w - 1.0
    else:
        hi = jnp.array([[im_w - 1.0], [im_h - 1.0]], jnp.float32)
    p1 = jnp.clip(p1, 0.0, hi)
    p2 = jnp.clip(p2, 0.0, hi)

    # two contiguous row sub-stores, no sublane concatenate
    boxes_ref[0, 0:2, :] = p1
    boxes_ref[0, 2:4, :] = p2


def retina_level_pallas(cls_ck, reg_4k, anc_4k, *, logit_thresh, weights,
                        bbox_xform_clip, im_w, im_h, tk=4096,
                        scores_dtype=jnp.bfloat16):
    """cls_ck: (N, C, K) logits f32; reg_4k: (N, 4, K); anc_4k: (4, K)."""
    N, C, K = cls_ck.shape
    # Either one full-extent K block (any K), or lane-dense 128-multiple tiles
    # with Pallas boundary padding on the last tile (masked in-kernel).
    TK = K if K <= tk else tk
    assert TK == K or TK % 128 == 0
    nk = pl.cdiv(K, TK)
    mask_tail = (K % TK) != 0

    kernel = functools.partial(
        _retina_level_kernel,
        logit_thresh=float(logit_thresh),
        bbox_xform_clip=float(bbox_xform_clip),
        weights=tuple(float(w) for w in weights),
        im_w=float(im_w), im_h=float(im_h),
        true_k=K, tile_k=TK, mask_tail=mask_tail)

    scores, boxes = pl.pallas_call(
        kernel,
        out_shape=(
            jax.ShapeDtypeStruct((N, C, K), scores_dtype),   # thresholded logits
            jax.ShapeDtypeStruct((N, 4, K), jnp.float32),    # decoded+clipped boxes
        ),
        grid=(N, nk),
        in_specs=[
            pl.BlockSpec((1, C, TK), lambda n, k: (n, 0, k)),
            pl.BlockSpec((1, 4, TK), lambda n, k: (n, 0, k)),
            pl.BlockSpec((4, TK), lambda n, k: (0, k)),
        ],
        out_specs=(
            pl.BlockSpec((1, C, TK), lambda n, k: (n, 0, k)),
            pl.BlockSpec((1, 4, TK), lambda n, k: (n, 0, k)),
        ),
        compiler_params=pltpu.CompilerParams(
            dimension_semantics=("parallel", "parallel")),
    )(cls_ck, reg_4k, anc_4k)
    return scores, boxes


# ----------------------------------------------------------------------------
# Pallas kernel 2: pairwise suppress mask (IoU > thresh & same label & col>row)
#   Inputs are already sorted by score (descending) so no permutation of the
#   (Mp, Mp) matrix is ever needed.  Output is bfloat16 {0, 1}.
# ----------------------------------------------------------------------------
def _suppress_mask_kernel(rows_ref, cols_ref, rlab_ref, clab_ref, mask_ref, *,
                          nms_thresh, tm, tn):
    rb = rows_ref[0].astype(jnp.float32)                   # (TM, 4)
    cb = cols_ref[0].astype(jnp.float32)                   # (4, TN)
    x1r, y1r, x2r, y2r = rb[:, 0:1], rb[:, 1:2], rb[:, 2:3], rb[:, 3:4]
    x1c, y1c, x2c, y2c = cb[0:1, :], cb[1:2, :], cb[2:3, :], cb[3:4, :]
    area_r = (x2r - x1r + 1.0) * (y2r - y1r + 1.0)         # (TM, 1)
    area_c = (x2c - x1c + 1.0) * (y2c - y1c + 1.0)         # (1, TN)
    w = jnp.maximum(jnp.minimum(x2r, x2c) - jnp.maximum(x1r, x1c) + 1.0, 0.0)
    h = jnp.maximum(jnp.minimum(y2r, y2c) - jnp.maximum(y1r, y1c) + 1.0, 0.0)
    inter = w * h
    union = area_r + area_c - inter
    iou_hit = inter > nms_thresh * union                   # exact, no divide

    same_label = rlab_ref[0] == clab_ref[0]                # (TM,1)==(1,TN)->(TM,TN)

    rg = (pl.program_id(1) * tm
          + jax.lax.broadcasted_iota(jnp.int32, (tm, tn), 0))
    cg = (pl.program_id(2) * tn
          + jax.lax.broadcasted_iota(jnp.int32, (tm, tn), 1))
    upper = cg > rg                                        # strictly later in score order

    mask = jnp.logical_and(jnp.logical_and(iou_hit, same_label), upper)
    mask_ref[0] = jnp.where(mask, 1.0, 0.0).astype(mask_ref.dtype)


def suppress_mask_pallas(boxes_m4, boxes_4m, rlab, clab, *, nms_thresh,
                         tile=512):
    """boxes_m4: (N, Mp, 4); boxes_4m: (N, 4, Mp); rlab: (N, Mp, 1) int32;
    clab: (N, 1, Mp) int32.  Mp multiple of 128 (and of `tile` if Mp > tile)."""
    N, Mp, _ = boxes_m4.shape
    TM = TN = min(tile, Mp)
    kernel = functools.partial(_suppress_mask_kernel,
                               nms_thresh=float(nms_thresh), tm=TM, tn=TN)
    return pl.pallas_call(
        kernel,
        out_shape=jax.ShapeDtypeStruct((N, Mp, Mp), jnp.bfloat16),
        grid=(N, Mp // TM, Mp // TN),
        in_specs=[
            pl.BlockSpec((1, TM, 4), lambda n, i, j: (n, i, 0)),
            pl.BlockSpec((1, 4, TN), lambda n, i, j: (n, 0, j)),
            pl.BlockSpec((1, TM, 1), lambda n, i, j: (n, i, 0)),
            pl.BlockSpec((1, 1, TN), lambda n, i, j: (n, 0, j)),
        ],
        out_specs=pl.BlockSpec((1, TM, TN), lambda n, i, j: (n, i, j)),
        compiler_params=pltpu.CompilerParams(
            dimension_semantics=("parallel", "parallel", "parallel")),
    )(boxes_m4, boxes_4m, rlab, clab)


# ----------------------------------------------------------------------------
# Plain-JAX glue: layout, top-k selection, greedy NMS, post-NMS top-n
# ----------------------------------------------------------------------------
def permute_and_flatten_ck(layer, N, A, C, H, W):
    # NCHW (N, A*C, H, W) -> (N, C, H*W*A): anchor axis last (lanes), same
    # (H, W, A) anchor ordering as the reference permute_and_flatten.
    # TODO(synk): read the raw NCHW layout directly in the level kernel to
    # avoid this extra HBM pass.
    layer = layer.reshape(N, A, C, H, W)
    layer = jnp.transpose(layer, (0, 2, 3, 4, 1))          # (N, C, H, W, A)
    return layer.reshape(N, C, H * W * A)


class RetinaPostProcessorPallas:
    def __init__(self, pre_nms_thresh, pre_nms_top_n, nms_thresh,
                 fpn_post_nms_top_n, min_size, num_classes,
                 box_coder_weights=(10.0, 10.0, 5.0, 5.0),
                 scores_dtype=jnp.bfloat16, level_tile_k=4096, iou_tile=512):
        self.pre_nms_thresh = float(pre_nms_thresh)
        self.pre_nms_top_n = pre_nms_top_n
        self.nms_thresh = nms_thresh
        self.fpn_post_nms_top_n = fpn_post_nms_top_n
        self.min_size = min_size
        self.num_classes = num_classes
        self.weights = box_coder_weights
        self.bbox_xform_clip = math.log(1000.0 / 16)
        self.scores_dtype = scores_dtype
        self.level_tile_k = level_tile_k
        self.iou_tile = iou_tile
        # pre-NMS threshold in logit space (sigmoid is monotone).
        p = self.pre_nms_thresh
        if p <= 0.0:
            self.logit_thresh = float("-inf")
        elif p >= 1.0:
            self.logit_thresh = float("inf")
        else:
            self.logit_thresh = math.log(p / (1.0 - p))

    # ---- per feature-map level -------------------------------------------
    def forward_for_single_feature_map(self, anchors, box_cls, box_regression,
                                       im_w, im_h):
        N, AC, H, W = box_cls.shape
        A = box_regression.shape[1] // 4
        C = AC // A
        cls_ck = permute_and_flatten_ck(box_cls, N, A, C, H, W)        # (N,C,K)
        reg_4k = permute_and_flatten_ck(box_regression, N, A, 4, H, W)  # (N,4,K)
        anc_4k = jnp.transpose(anchors, (1, 0)).astype(jnp.float32)     # (4, K)

        thr_logits, boxes_4k = retina_level_pallas(
            cls_ck, reg_4k, anc_4k,
            logit_thresh=self.logit_thresh, weights=self.weights,
            bbox_xform_clip=self.bbox_xform_clip,
            im_w=im_w, im_h=im_h, tk=self.level_tile_k,
            scores_dtype=self.scores_dtype)

        K = cls_ck.shape[2]
        top_n = min(self.pre_nms_top_n, C * K)
        flat = thr_logits.reshape(N, C * K)                 # bf16, -inf masked
        top_vals, top_idx = jax.lax.top_k(flat, top_n)
        top_logits = top_vals.astype(jnp.float32)
        loc = top_idx % K                                   # anchor index
        labels = (top_idx // K + 1).astype(jnp.int32)       # 1-based class id

        idx = jnp.broadcast_to(loc[:, None, :], (N, 4, top_n))
        sel_boxes_4m = jnp.take_along_axis(boxes_4k, idx, axis=2)  # (N,4,top_n)

        # candidate = passed pre-NMS threshold (and not a padded K-tail slot)
        cand = top_logits > -jnp.inf
        # remove_small_boxes on the selected boxes only (xywh with TO_REMOVE=1)
        ws = sel_boxes_4m[:, 2, :] - sel_boxes_4m[:, 0, :] + 1.0
        hs = sel_boxes_4m[:, 3, :] - sel_boxes_4m[:, 1, :] + 1.0
        size_keep = (ws >= self.min_size) & (hs >= self.min_size)
        valid = cand & size_keep

        scores = jax.nn.sigmoid(top_logits)                 # reference score field
        return sel_boxes_4m, scores, labels, valid

    # ---- cross-level NMS + post-NMS top-n ---------------------------------
    def select_over_all_levels(self, boxes_4m, scores, labels, valid):
        N, _, M = boxes_4m.shape
        # Sort by score ONCE per image (descending; invalid -> -inf -> last).
        s = jnp.where(valid, scores, -jnp.inf)
        order = jnp.argsort(-s, axis=1)                     # stable
        scores_s = jnp.take_along_axis(s, order, axis=1)
        labels_s = jnp.take_along_axis(labels, order, axis=1)
        valid_s = jnp.take_along_axis(valid, order, axis=1)
        boxes_s_4m = jnp.take_along_axis(
            boxes_4m, jnp.broadcast_to(order[:, None, :], (N, 4, M)), axis=2)

        # Pad M to a lane-aligned, tile-aligned size (small arrays, cheap).
        Mp = _round_up(M, 128)
        if Mp > self.iou_tile:
            Mp = _round_up(Mp, self.iou_tile)
        pad = Mp - M
        if pad:
            boxes_s_4m = jnp.pad(boxes_s_4m, ((0, 0), (0, 0), (0, pad)))
            scores_s = jnp.pad(scores_s, ((0, 0), (0, pad)),
                               constant_values=-jnp.inf)
            labels_s = jnp.pad(labels_s, ((0, 0), (0, pad)))
            valid_s = jnp.pad(valid_s, ((0, 0), (0, pad)))

        boxes_s_m4 = jnp.transpose(boxes_s_4m, (0, 2, 1))   # (N, Mp, 4)
        rlab = labels_s[:, :, None]                         # (N, Mp, 1)
        clab = labels_s[:, None, :]                         # (N, 1, Mp)

        mask = suppress_mask_pallas(boxes_s_m4, boxes_s_4m, rlab, clab,
                                    nms_thresh=self.nms_thresh,
                                    tile=self.iou_tile)     # (N, Mp, Mp) bf16

        # Greedy per-class NMS: score-order sequential suppression.
        # TODO(synk): a fully in-kernel sequential Pallas NMS (keep flags
        # resident in VMEM) would remove this XLA fori_loop + the mask HBM
        # round-trip; left in plain JAX here.
        def body(i, keep):
            row = jax.lax.dynamic_index_in_dim(mask, i, axis=1,
                                               keepdims=False) > 0.5   # (N,Mp)
            gate = jax.lax.dynamic_slice_in_dim(keep, i, 1, axis=1)     # (N,1)
            return keep & ~(row & gate)

        kept = jax.lax.fori_loop(0, Mp, body, valid_s)      # (N, Mp) bool

        # Post-NMS top-n (kthvalue-style threshold, ties kept like reference).
        if self.fpn_post_nms_top_n > 0:
            n_det = jnp.sum(kept, axis=1)
            kept_scores = jnp.where(kept, scores_s, -jnp.inf)
            sorted_desc = -jnp.sort(-kept_scores, axis=1)
            k = min(self.fpn_post_nms_top_n, Mp)
            img_thresh = jnp.where(n_det > self.fpn_post_nms_top_n,
                                   sorted_desc[:, k - 1], -jnp.inf)
            final_keep = kept & (scores_s >= img_thresh[:, None])
        else:
            final_keep = kept
        return boxes_s_m4, scores_s, labels_s, final_keep

    def __call__(self, anchors_per_level, objectness, box_regression,
                 im_w, im_h):
        all_b, all_s, all_l, all_v = [], [], [], []
        for anc, o, b in zip(anchors_per_level, objectness, box_regression):
            bb, ss, ll, vv = self.forward_for_single_feature_map(
                anc, o, b, im_w, im_h)
            all_b.append(bb); all_s.append(ss); all_l.append(ll); all_v.append(vv)
        boxes_4m = jnp.concatenate(all_b, axis=2)
        scores = jnp.concatenate(all_s, axis=1)
        labels = jnp.concatenate(all_l, axis=1)
        valid = jnp.concatenate(all_v, axis=1)
        return self.select_over_all_levels(boxes_4m, scores, labels, valid)


# ----------------------------------------------------------------------------
# Deterministic synthetic inputs
# ----------------------------------------------------------------------------
def make_anchors(H, W, stride, sizes):
    shifts_x = jnp.arange(W, dtype=jnp.float32) * stride
    shifts_y = jnp.arange(H, dtype=jnp.float32) * stride
    sy, sx = jnp.meshgrid(shifts_y, shifts_x, indexing="ij")
    shifts = jnp.stack([sx.ravel(), sy.ravel(), sx.ravel(), sy.ravel()], axis=1)
    cell = jnp.stack([
        jnp.array([-s / 2.0, -s / 2.0, s / 2.0 - 1.0, s / 2.0 - 1.0],
                  dtype=jnp.float32) for s in sizes])
    return (shifts[:, None, :] + cell[None, :, :]).reshape(-1, 4)


if __name__ == "__main__":
    key = jax.random.PRNGKey(0)
    N, A, C = 2, 4, 4                 # C = #foreground classes
    num_classes = C + 1
    im_w = im_h = 64
    # (H, W, stride): K = H*W*A = 256 and 128 (lane-aligned, no tail masking)
    levels = [(8, 8, 8), (4, 8, 16)]

    post = RetinaPostProcessorPallas(
        pre_nms_thresh=0.5, pre_nms_top_n=32, nms_thresh=0.5,
        fpn_post_nms_top_n=20, min_size=0, num_classes=num_classes)

    keys = jax.random.split(key, 2 * len(levels))
    objectness, box_regression, anchors_per_level = [], [], []
    for li, (H, W, stride) in enumerate(levels):
        k1, k2 = keys[2 * li], keys[2 * li + 1]
        objectness.append(jax.random.normal(k1, (N, A * C, H, W), jnp.float32))
        box_regression.append(
            0.5 * jax.random.normal(k2, (N, A * 4, H, W), jnp.float32))
        anchors_per_level.append(
            make_anchors(H, W, stride,
                         (2.0 * stride, 3.0 * stride, 4.0 * stride,
                          5.0 * stride)))

    boxes, scores, labels, keep = post(
        anchors_per_level, objectness, box_regression, im_w, im_h)
    jax.block_until_ready((boxes, scores, labels, keep))
    print("KERNEL_OK")
</pallas_src>

<mosaic_0001>
module attributes {stable_mosaic.version = 11 : i64} {
  func.func @_retina_level_kernel(%arg0: i32, %arg1: i32, %arg2: memref<1x4x256xf32, #tpu.memory_space<vmem>>, %arg3: memref<1x4x256xf32, #tpu.memory_space<vmem>>, %arg4: memref<4x256xf32, #tpu.memory_space<vmem>>, %arg5: memref<1x4x256xbf16, #tpu.memory_space<vmem>>, %arg6: memref<1x4x256xf32, #tpu.memory_space<vmem>>) attributes {dimension_semantics = [#tpu.dimension_semantics<parallel>, #tpu.dimension_semantics<parallel>], iteration_bounds = array<i64: 2, 1>, scalar_prefetch = 0 : i64, scratch_operands = 0 : i64, tpu.core_type = #tpu.core_type<tc>, window_params = [{transform_indices = @transform_0, window_bounds = array<i64: 1, 4, 256>}, {transform_indices = @transform_1, window_bounds = array<i64: 1, 4, 256>}, {transform_indices = @transform_2, window_bounds = array<i64: 4, 256>}, {transform_indices = @transform_3, window_bounds = array<i64: 1, 4, 256>}, {transform_indices = @transform_4, window_bounds = array<i64: 1, 4, 256>}]} {
    %c0 = arith.constant 0 : index
    %c0_0 = arith.constant 0 : index
    %c0_1 = arith.constant 0 : index
    %0 = vector.load %arg2[%c0, %c0_0, %c0_1] : memref<1x4x256xf32, #tpu.memory_space<vmem>>, vector<1x4x256xf32>
    %1 = vector.shape_cast %0 : vector<1x4x256xf32> to vector<4x256xf32>
    %cst = arith.constant 0.000000e+00 : f32
    %2 = vector.broadcast %cst : f32 to vector<4x256xf32>
    %3 = arith.cmpf ogt, %1, %2 : vector<4x256xf32>
    %cst_2 = arith.constant 0xFF800000 : f32
    %4 = vector.broadcast %cst_2 : f32 to vector<4x256xf32>
    %5 = arith.select %3, %1, %4 : vector<4x256xi1>, vector<4x256xf32>
    %6 = arith.truncf %5 : vector<4x256xf32> to vector<4x256xbf16>
    %c0_3 = arith.constant 0 : index
    %c0_4 = arith.constant 0 : index
    %c0_5 = arith.constant 0 : index
    %7 = vector.load %arg5[%c0_3, %c0_4, %c0_5] : memref<1x4x256xbf16, #tpu.memory_space<vmem>>, vector<1x4x256xbf16>
    %8 = vector.shape_cast %7 : vector<1x4x256xbf16> to vector<4x256xbf16>
    %9 = vector.shape_cast %6 : vector<4x256xbf16> to vector<1x4x256xbf16>
    tpu.vector_store %arg5[%c0_3, %c0_4, %c0_5], %9 {strides = array<i32>} : memref<1x4x256xbf16, #tpu.memory_space<vmem>>, vector<1x4x256xbf16>,
    %c0_6 = arith.constant 0 : index
    %c0_7 = arith.constant 0 : index
    %10 = vector.load %arg4[%c0_6, %c0_7] : memref<4x256xf32, #tpu.memory_space<vmem>>, vector<4x256xf32>
    %c0_8 = arith.constant 0 : index
    %c0_9 = arith.constant 0 : index
    %c0_10 = arith.constant 0 : index
    %11 = vector.load %arg3[%c0_8, %c0_9, %c0_10] : memref<1x4x256xf32, #tpu.memory_space<vmem>>, vector<1x4x256xf32>
    %12 = vector.shape_cast %11 : vector<1x4x256xf32> to vector<4x256xf32>
    %13 = vector.extract_strided_slice %10 {offsets = [0, 0], sizes = [2, 256], strides = [1, 1]} : vector<4x256xf32> to vector<2x256xf32>
    %14 = vector.extract_strided_slice %10 {offsets = [2, 0], sizes = [2, 256], strides = [1, 1]} : vector<4x256xf32> to vector<2x256xf32>
    %15 = arith.subf %14, %13 : vector<2x256xf32>
    %cst_11 = arith.constant 1.000000e+00 : f32
    %16 = vector.broadcast %cst_11 : f32 to vector<2x256xf32>
    %17 = arith.addf %15, %16 : vector<2x256xf32>
    %cst_12 = arith.constant 5.000000e-01 : f32
    %18 = vector.broadcast %cst_12 : f32 to vector<2x256xf32>
    %19 = arith.mulf %18, %17 : vector<2x256xf32>
    %20 = arith.addf %13, %19 : vector<2x256xf32>
    %21 = vector.extract_strided_slice %12 {offsets = [0, 0], sizes = [2, 256], strides = [1, 1]} : vector<4x256xf32> to vector<2x256xf32>
    %cst_13 = arith.constant 1.000000e-01 : f32
    %22 = vector.broadcast %cst_13 : f32 to vector<2x256xf32>
    %23 = arith.mulf %21, %22 : vector<2x256xf32>
    %24 = vector.extract_strided_slice %12 {offsets = [2, 0], sizes = [2, 256], strides = [1, 1]} : vector<4x256xf32> to vector<2x256xf32>
    %cst_14 = arith.constant 2.000000e-01 : f32
    %25 = vector.broadcast %cst_14 : f32 to vector<2x256xf32>
    %26 = arith.mulf %24, %25 : vector<2x256xf32>
    %cst_15 = arith.constant 4.13516665 : f32
    %27 = vector.broadcast %cst_15 : f32 to vector<2x256xf32>
    %28 = arith.minimumf %26, %27 : vector<2x256xf32>
    %29 = arith.mulf %23, %17 : vector<2x256xf32>
    %30 = arith.addf %29, %20 : vector<2x256xf32>
    %31 = math.exp %28 : vector<2x256xf32>
    %32 = arith.mulf %31, %17 : vector<2x256xf32>
    %cst_16 = arith.constant 5.000000e-01 : f32
    %33 = vector.broadcast %cst_16 : f32 to vector<2x256xf32>
    %34 = arith.mulf %33, %32 : vector<2x256xf32>
    %35 = arith.subf %30, %34 : vector<2x256xf32>
    %cst_17 = arith.constant 5.000000e-01 : f32
    %36 = vector.broadcast %cst_17 : f32 to vector<2x256xf32>
    %37 = arith.mulf %36, %32 : vector<2x256xf32>
    %38 = arith.addf %30, %37 : vector<2x256xf32>
    %cst_18 = arith.constant 1.000000e+00 : f32
    %39 = vector.broadcast %cst_18 : f32 to vector<2x256xf32>
    %40 = arith.subf %38, %39 : vector<2x256xf32>
    %cst_19 = arith.constant 0.000000e+00 : f32
    %cst_20 = arith.constant 6.300000e+01 : f32
    %41 = vector.broadcast %cst_19 : f32 to vector<2x256xf32>
    %42 = arith.maximumf %41, %35 : vector<2x256xf32>
    %43 = vector.broadcast %cst_20 : f32 to vector<2x256xf32>
    %44 = arith.minimumf %43, %42 : vector<2x256xf32>
    %cst_21 = arith.constant 0.000000e+00 : f32
    %cst_22 = arith.constant 6.300000e+01 : f32
    %45 = vector.broadcast %cst_21 : f32 to vector<2x256xf32>
    %46 = arith.maximumf %45, %40 : vector<2x256xf32>
    %47 = vector.broadcast %cst_22 : f32 to vector<2x256xf32>
    %48 = arith.minimumf %47, %46 : vector<2x256xf32>
    %c0_23 = arith.constant 0 : index
    %c0_24 = arith.constant 0 : index
    %c0_25 = arith.constant 0 : index
    %49 = vector.load %arg6[%c0_23, %c0_24, %c0_25] : memref<1x4x256xf32, #tpu.memory_space<vmem>>, vector<1x2x256xf32>
    %50 = vector.shape_cast %49 : vector<1x2x256xf32> to vector<2x256xf32>
    %51 = vector.shape_cast %44 : vector<2x256xf32> to vector<1x2x256xf32>
    tpu.vector_store %arg6[%c0_23, %c0_24, %c0_25], %51 {strides = array<i32>} : memref<1x4x256xf32, #tpu.memory_space<vmem>>, vector<1x2x256xf32>,
    %c0_26 = arith.constant 0 : index
    %c2 = arith.constant 2 : index
    %c0_27 = arith.constant 0 : index
    %52 = vector.load %arg6[%c0_26, %c2, %c0_27] : memref<1x4x256xf32, #tpu.memory_space<vmem>>, vector<1x2x256xf32>
    %53 = vector.shape_cast %52 : vector<1x2x256xf32> to vector<2x256xf32>
    %54 = vector.shape_cast %48 : vector<2x256xf32> to vector<1x2x256xf32>
    tpu.vector_store %arg6[%c0_26, %c2, %c0_27], %54 {strides = array<i32>} : memref<1x4x256xf32, #tpu.memory_space<vmem>>, vector<1x2x256xf32>,
    return
  }
  func.func @transform_0(%arg0: i32, %arg1: i32) -> (i32, i32, i32) {
    %c0_i32 = arith.constant 0 : i32
    %c0_i32_0 = arith.constant 0 : i32
    return %arg0, %c0_i32, %arg1 : i32, i32, i32
  }
  func.func @transform_1(%arg0: i32, %arg1: i32) -> (i32, i32, i32) {
    %c0_i32 = arith.constant 0 : i32
    %c0_i32_0 = arith.constant 0 : i32
    return %arg0, %c0_i32, %arg1 : i32, i32, i32
  }
  func.func @transform_2(%arg0: i32, %arg1: i32) -> (i32, i32) {
    %c0_i32 = arith.constant 0 : i32
    %c0_i32_0 = arith.constant 0 : i32
    return %c0_i32, %arg1 : i32, i32
  }
  func.func @transform_3(%arg0: i32, %arg1: i32) -> (i32, i32, i32) {
    %c0_i32 = arith.constant 0 : i32
    %c0_i32_0 = arith.constant 0 : i32
    return %arg0, %c0_i32, %arg1 : i32, i32, i32
  }
  func.func @transform_4(%arg0: i32, %arg1: i32) -> (i32, i32, i32) {
    %c0_i32 = arith.constant 0 : i32
    %c0_i32_0 = arith.constant 0 : i32
    return %arg0, %c0_i32, %arg1 : i32, i32, i32
  }
}

</mosaic_0001>

<llo_original>
// kernel: tpu_custom_call.1
$region0: #{tpu_custom_call.1}
  #allocation0 [shape = 'u32[]', space=smem, size = 0x4, offset = 0x4, fixed_abs, tag = 'smem constant byte address 0x4 - core index']
  #allocation1 [shape = 'u32[144,128]{1,0:T(1,128)}', space=vmem, size = 0x12000, scoped, tag = 'internal scratch']
  %s0 = inlined_call_operand.hbm [shape: f32[2,4,256], index: 0, kind: input, shape index: {}]
  %s1 = inlined_call_operand.hbm [shape: f32[2,4,256], index: 1, kind: input, shape index: {}]
  %s2 = inlined_call_operand.hbm [shape: f32[4,256], index: 2, kind: input, shape index: {}]
  %s3 = inlined_call_operand.hbm [shape: bf16[2,4,256], index: 3, kind: output, shape index: {0}]
  %s4 = inlined_call_operand.hbm [shape: f32[2,4,256], index: 4, kind: output, shape index: {1}]
  %5 = xla_tuple %s3, %s4
  %s6 = sld [smem:[#allocation0]]
  $region65: #{tpu_custom_call.1} parent=0
    _
  %s8 = ssub.s32 1, %s6
  %s9 = scalar_select 0, %s8, %s6
  $region1: #{tpu_custom_call.1} parent=0
    #allocation2 [shape = 'u8[8192]{0}', space=vmem, size = 0x2000, scoped, tag = 'input window, operand 0']
    #allocation3 [shape = 's32[2]{0}', space=sflag, size = 0x8, scoped, tag = 'scoped memory for tpu_custom_call.1']
    #allocation4 [shape = 's32[2]{0}', space=sflag, size = 0x8, scoped, tag = 'scoped memory for tpu_custom_call.1']
    #allocation5 [shape = 'u8[8192]{0}', space=vmem, size = 0x2000, scoped, tag = 'input window, operand 1']
    #allocation6 [shape = 's32[2]{0}', space=sflag, size = 0x8, scoped, tag = 'scoped memory for tpu_custom_call.1']
    #allocation7 [shape = 'u8[4096]{0}', space=vmem, size = 0x1000, scoped, tag = 'input window, operand 2, single buffered']
    #allocation8 [shape = 'u8[4096]{0}', space=vmem, size = 0x1000, scoped, tag = 'output window, operand 0']
    #allocation9 [shape = 'u8[8192]{0}', space=vmem, size = 0x2000, scoped, tag = 'output window, operand 1']
    #allocation10 [shape = 's32[2]{0}', space=sflag, size = 0x8, scoped, tag = 'scoped memory for tpu_custom_call.1']
    %10 = vsyncpa [#allocation3], 0
    %s11 = scalar_lea.sflag [#allocation3], 1
    %12 = vsyncpa %s11, 0
    %13 = vsyncpa [#allocation6], 0
    %s14 = scalar_lea.sflag [#allocation6], 1
    %15 = vsyncpa %s14, 0
    %16 = vsyncpa [#allocation4], 0
    %s17 = scalar_lea.sflag [#allocation4], 1
    %18 = vsyncpa %s17, 0
    %19 = vsyncpa [#allocation10], 0
    %s20 = scalar_lea.sflag [#allocation10], 1
    %21 = vsyncpa %s20, 0
    loop: start=0, step=1, limit=4
    $region2: #{tpu_custom_call.1} parent=1 // loop_pre_header
      _
    $region3: #{tpu_custom_call.1} parent=1 // loop_header
      %s23 = sphi 0, %s27
      %p24 = scmp.ge.s32.totalorder %s23, 4
      %s30 = sphi 0, %s42
      %s31 = sphi 0, %s38
      %s32 = sphi 0, %s30
      %s33 = sphi 0, %s31
      %s34 = sphi 0, %s32
      %s35 = sphi 0, %s33
      %s47 = sphi 0, %s49
      %s50 = sphi 0, %s47
      %s51 = sphi 0, %s50
      %s67 = sphi 0, %s51
      %s75 = sphi 0, %s77
      %s78 = sphi 0, %s75
      %s79 = sphi 0, %s78
      %s95 = sphi 0, %s79
      %s101 = sphi 0, %s103
      %s104 = sphi 0, %s101
      %s105 = sphi 0, %s104
      %s121 = sphi 0, %s105
      %s129 = sphi 0, %s131
      %s132 = sphi 0, %s129
      %s133 = sphi 0, %s132
      %s149 = sphi 0, %s133
      %s157 = sphi 0, %s159
      %s160 = sphi 0, %s157
      %s161 = sphi 0, %s160
      %s177 = sphi 0, %s161
    $region4: #{tpu_custom_call.1} parent=1 // loop_header_branch
      %26 = sbr.rel (%p24) target = $region8
    $region5: #{tpu_custom_call.1} parent=1 // loop_body
      %s28 = ssub.s32 %s23, 1
      %s29 = ssub.s32 %s23, 2
      %s36 = sadd.s32 1, %s31
      %p37 = scmp.ge.s32.totalorder %s36, 1
      %s38 = scalar_select %p37, 0, %s36
      %s39 = sadd.s32 1, %s30
      %s40 = scalar_select %p37, %s39, %s30
      %p41 = scmp.ge.s32.totalorder %s40, 2
      %s42 = scalar_select %p41, 0, %s40
      %s43 = ssub.s32 %s30, %s42
      %s44 = ssub.s32 %s31, %s38
      %s45 = sor.u32 %s43, %s44
      %p46 = scmp.eq.s32.totalorder %s45, 0
      %s48 = sadd.s32 %s47, 1
      %s49 = scalar_select %p46, %s47, %s48
      %p52 = pneg %p46
      %p53 = scmp.eq.s32.totalorder %s23, 1
      %p54 = por %p52, %p53
      %p55 = scmp.ne.s32.totalorder %s47, %s50
      %p56 = scmp.eq.s32.totalorder %s23, 0
      %p57 = por %p55, %p56
      %p58 = scmp.ne.s32.totalorder %s47, %s50
      %p59 = scmp.eq.s32.totalorder %s28, 1
      %p60 = por %p58, %p59
      %p61 = scmp.ne.s32.totalorder %s50, %s51
      %p62 = scmp.eq.s32.totalorder %s28, 0
      %p63 = por %p61, %p62
      %p64 = scmp.ne.s32.totalorder %s50, %s51
      %p65 = scmp.eq.s32.totalorder %s29, 1
      %p66 = por %p64, %p65
      %p68 = scmp.ne.s32.totalorder %s51, %s67
      %p69 = scmp.eq.s32.totalorder %s29, 0
      %p70 = por %p68, %p69
      %s71 = ssub.s32 %s30, %s42
      %s72 = ssub.s32 %s31, %s38
      %s73 = sor.u32 %s71, %s72
      %p74 = scmp.eq.s32.totalorder %s73, 0
      %s76 = sadd.s32 %s75, 1
      %s77 = scalar_select %p74, %s75, %s76
      %p80 = pneg %p74
      %p81 = scmp.eq.s32.totalorder %s23, 1
      %p82 = por %p80, %p81
      %p83 = scmp.ne.s32.totalorder %s75, %s78
      %p84 = scmp.eq.s32.totalorder %s23, 0
      %p85 = por %p83, %p84
      %p86 = scmp.ne.s32.totalorder %s75, %s78
      %p87 = scmp.eq.s32.totalorder %s28, 1
      %p88 = por %p86, %p87
      %p89 = scmp.ne.s32.totalorder %s78, %s79
      %p90 = scmp.eq.s32.totalorder %s28, 0
      %p91 = por %p89, %p90
      %p92 = scmp.ne.s32.totalorder %s78, %s79
      %p93 = scmp.eq.s32.totalorder %s29, 1
      %p94 = por %p92, %p93
      %p96 = scmp.ne.s32.totalorder %s79, %s95
      %p97 = scmp.eq.s32.totalorder %s29, 0
      %p98 = por %p96, %p97
      %s99 = ssub.s32 %s31, %s38
      %p100 = scmp.eq.s32.totalorder %s99, 0
      %s102 = sadd.s32 %s101, 1
      %s103 = scalar_select %p100, %s101, %s102
      %p106 = pneg %p100
      %p107 = scmp.eq.s32.totalorder %s23, 1
      %p108 = por %p106, %p107
      %p109 = scmp.ne.s32.totalorder %s101, %s104
      %p110 = scmp.eq.s32.totalorder %s23, 0
      %p111 = por %p109, %p110
      %p112 = scmp.ne.s32.totalorder %s101, %s104
      %p113 = scmp.eq.s32.totalorder %s28, 1
      %p114 = por %p112, %p113
      %p115 = scmp.ne.s32.totalorder %s104, %s105
      %p116 = scmp.eq.s32.totalorder %s28, 0
      %p117 = por %p115, %p116
      %p118 = scmp.ne.s32.totalorder %s104, %s105
      %p119 = scmp.eq.s32.totalorder %s29, 1
      %p120 = por %p118, %p119
      %p122 = scmp.ne.s32.totalorder %s105, %s121
      %p123 = scmp.eq.s32.totalorder %s29, 0
      %p124 = por %p122, %p123
      %s125 = ssub.s32 %s30, %s42
      %s126 = ssub.s32 %s31, %s38
      %s127 = sor.u32 %s125, %s126
      %p128 = scmp.eq.s32.totalorder %s127, 0
      %s130 = sadd.s32 %s129, 1
      %s131 = scalar_select %p128, %s129, %s130
      %p134 = pneg %p128
      %p135 = scmp.eq.s32.totalorder %s23, 1
      %p136 = por %p134, %p135
      %p137 = scmp.ne.s32.totalorder %s129, %s132
      %p138 = scmp.eq.s32.totalorder %s23, 0
      %p139 = por %p137, %p138
      %p140 = scmp.ne.s32.totalorder %s129, %s132
      %p141 = scmp.eq.s32.totalorder %s28, 1
      %p142 = por %p140, %p141
      %p143 = scmp.ne.s32.totalorder %s132, %s133
      %p144 = scmp.eq.s32.totalorder %s28, 0
      %p145 = por %p143, %p144
      %p146 = scmp.ne.s32.totalorder %s132, %s133
      %p147 = scmp.eq.s32.totalorder %s29, 1
      %p148 = por %p146, %p147
      %p150 = scmp.ne.s32.totalorder %s133, %s149
      %p151 = scmp.eq.s32.totalorder %s29, 0
      %p152 = por %p150, %p151
      %s153 = ssub.s32 %s30, %s42
      %s154 = ssub.s32 %s31, %s38
      %s155 = sor.u32 %s153, %s154
      %p156 = scmp.eq.s32.totalorder %s155, 0
      %s158 = sadd.s32 %s157, 1
      %s159 = scalar_select %p156, %s157, %s158
      %p162 = pneg %p156
      %p163 = scmp.eq.s32.totalorder %s23, 1
      %p164 = por %p162, %p163
      %p165 = scmp.ne.s32.totalorder %s157, %s160
      %p166 = scmp.eq.s32.totalorder %s23, 0
      %p167 = por %p165, %p166
      %p168 = scmp.ne.s32.totalorder %s157, %s160
      %p169 = scmp.eq.s32.totalorder %s28, 1
      %p170 = por %p168, %p169
      %p171 = scmp.ne.s32.totalorder %s160, %s161
      %p172 = scmp.eq.s32.totalorder %s28, 0
      %p173 = por %p171, %p172
      %p174 = scmp.ne.s32.totalorder %s160, %s161
      %p175 = scmp.eq.s32.totalorder %s29, 1
      %p176 = por %p174, %p175
      %p178 = scmp.ne.s32.totalorder %s161, %s177
      %p179 = scmp.eq.s32.totalorder %s29, 0
      %p180 = por %p178, %p179
      %p181 = scmp.le.s32.totalorder 1, %s23
      %p182 = scmp.lt.s32.totalorder %s23, 3
      %p183 = pnand %p181, %p182
      %p184 = pneg %p183
      // Predicated region
      $region9: #{tpu_custom_call.1} parent=5 // pred_check
        _
      $region10: #{tpu_custom_call.1} parent=5 // pred_check_branch
        %186 = sbr.rel (%p183) target = $region12
      $region11: #{tpu_custom_call.1} parent=5 // pred_region
        %s187 = ssub.s32 %s23, 1
        // Predicated region
        $region13: #{tpu_custom_call.1} parent=11 // pred_check
          %p188 = pneg %p117
        $region14: #{tpu_custom_call.1} parent=11 // pred_check_branch
          %190 = sbr.rel (%p188) target = $region16
        $region15: #{tpu_custom_call.1} parent=11 // pred_region
          %s191 = smul.u32 2, %s33
          %s193 = ssub.s32 128, 128
          %194 = vsyncadd [#allocation6], %s193
          %s195 = smul.addr %s191, 64
          %s196 = scalar_lea.hbm %s2, %s195
          %s198 = sshll.u32 [#allocation7], 4
          %s199 = int_to_ptr.vmem [resolvable:$true] %s198
          %201 = dma.hbm_to_vmem [thread:$0]  %s196, 128, %s199, [#allocation6]
        $region16: #{tpu_custom_call.1} parent=11 // pred_fallthru
          _
      $region12: #{tpu_custom_call.1} parent=5 // pred_fallthru
        _
      %p202 = scmp.lt.s32.totalorder %s23, 2
      // Predicated region
      $region17: #{tpu_custom_call.1} parent=5 // pred_check
        %p203 = pneg %p202
      $region18: #{tpu_custom_call.1} parent=5 // pred_check_branch
        %205 = sbr.rel (%p203) target = $region20
      $region19: #{tpu_custom_call.1} parent=5 // pred_region
        // Predicated region
        $region21: #{tpu_custom_call.1} parent=19 // pred_check
          %p206 = pneg %p57
        $region22: #{tpu_custom_call.1} parent=19 // pred_check_branch
          %208 = sbr.rel (%p206) target = $region24
        $region23: #{tpu_custom_call.1} parent=19 // pred_region
          %s209 = sand.u32 %s47, 1
          %s210 = scalar_lea.sflag [#allocation3], %s209
          %s211 = sand.u32 %s47, 1
          %s212 = smul.addr %s211, 8
          %s213 = scalar_lea.vmem [#allocation2], %s212
          %s214 = smul.u32 2, %s31
          %s216 = ssub.s32 128, 128
          %217 = vsyncadd %s210, %s216
          %s218 = smul.addr %s30, 2
          %s219 = sadd.s32 %s214, %s218
          %s220 = smul.addr %s219, 64
          %s221 = scalar_lea.hbm %s0, %s220
          %s223 = sshll.u32 %s213, 4
          %s224 = int_to_ptr.vmem [resolvable:$true] %s223
          %226 = dma.hbm_to_vmem [thread:$0]  %s221, 128, %s224, %s210
        $region24: #{tpu_custom_call.1} parent=19 // pred_fallthru
          _
        // Predicated region
        $region25: #{tpu_custom_call.1} parent=19 // pred_check
          %p227 = pneg %p85
        $region26: #{tpu_custom_call.1} parent=19 // pred_check_branch
          %229 = sbr.rel (%p227) target = $region28
        $region27: #{tpu_custom_call.1} parent=19 // pred_region
          %s230 = sand.u32 %s23, 1
          %s231 = scalar_lea.sflag [#allocation6], %s230
          %s232 = sand.u32 %s75, 1
          %s233 = smul.addr %s232, 8
          %s234 = scalar_lea.vmem [#allocation5], %s233
          %s235 = smul.u32 2, %s31
          %s237 = ssub.s32 128, 128
          %238 = vsyncadd %s231, %s237
          %s239 = smul.addr %s30, 2
          %s240 = sadd.s32 %s235, %s239
          %s241 = smul.addr %s240, 64
          %s242 = scalar_lea.hbm %s1, %s241
          %s244 = sshll.u32 %s234, 4
          %s245 = int_to_ptr.vmem [resolvable:$true] %s244
          %247 = dma.hbm_to_vmem [thread:$0]  %s242, 128, %s245, %s231
        $region28: #{tpu_custom_call.1} parent=19 // pred_fallthru
          _
      $region20: #{tpu_custom_call.1} parent=5 // pred_fallthru
        _
      %p248 = scmp.le.s32.totalorder 1, %s23
      %p249 = scmp.lt.s32.totalorder %s23, 3
      %p250 = pnand %p248, %p249
      %p251 = pneg %p250
      // Predicated region
      $region29: #{tpu_custom_call.1} parent=5 // pred_check
        _
      $region30: #{tpu_custom_call.1} parent=5 // pred_check_branch
        %253 = sbr.rel (%p250) target = $region32
      $region31: #{tpu_custom_call.1} parent=5 // pred_region
        %s254 = ssub.s32 %s23, 1
        %s255 = sand.u32 %s50, 1
        %s256 = scalar_lea.sflag [#allocation3], %s255
        %s257 = sand.u32 %s50, 1
        %s258 = smul.addr %s257, 8
        %s259 = scalar_lea.vmem [#allocation2], %s258
        // Predicated region
        $region33: #{tpu_custom_call.1} parent=31 // pred_check
          %p260 = pneg %p63
        $region34: #{tpu_custom_call.1} parent=31 // pred_check_branch
          %262 = sbr.rel (%p260) target = $region36
        $region35: #{tpu_custom_call.1} parent=31 // pred_region
          %263 = dma.done %s256, 128
        $region36: #{tpu_custom_call.1} parent=31 // pred_fallthru
          _
        %s264 = sand.u32 %s28, 1
        %s265 = scalar_lea.sflag [#allocation6], %s264
        %s266 = sand.u32 %s78, 1
        %s267 = smul.addr %s266, 8
        %s268 = scalar_lea.vmem [#allocation5], %s267
        // Predicated region
        $region37: #{tpu_custom_call.1} parent=31 // pred_check
          %p269 = pneg %p91
        $region38: #{tpu_custom_call.1} parent=31 // pred_check_branch
          %271 = sbr.rel (%p269) target = $region40
        $region39: #{tpu_custom_call.1} parent=31 // pred_region
          %272 = dma.done %s265, 128
        $region40: #{tpu_custom_call.1} parent=31 // pred_fallthru
          _
        // Predicated region
        $region41: #{tpu_custom_call.1} parent=31 // pred_check
          %p273 = pneg %p117
        $region42: #{tpu_custom_call.1} parent=31 // pred_check_branch
          %275 = sbr.rel (%p273) target = $region44
        $region43: #{tpu_custom_call.1} parent=31 // pred_region
          %276 = dma.done [#allocation6], 128
        $region44: #{tpu_custom_call.1} parent=31 // pred_fallthru
          _
        %s277 = sand.u32 %s50, 1
        %s278 = scalar_lea.sflag [#allocation3], %s277
        %s279 = sand.u32 %s50, 1
        %s280 = smul.addr %s279, 8
        %s281 = scalar_lea.vmem [#allocation2], %s280
        %p282 = pneg %p63
        %p283 = pneg %p60
        %s284 = sand.u32 %s28, 1
        %s285 = scalar_lea.sflag [#allocation6], %s284
        %s286 = sand.u32 %s78, 1
        %s287 = smul.addr %s286, 8
        %s288 = scalar_lea.vmem [#allocation5], %s287
        %p289 = pneg %p91
        %p290 = pneg %p88
        %p291 = pneg %p117
        %p292 = pneg %p114
        %p293 = pneg %p145
        %p294 = pneg %p142
        %s295 = sand.u32 %s132, 1
        %s296 = scalar_lea.sflag [#allocation4], %s295
        %s297 = sand.u32 %s132, 1
        %s298 = smul.addr %s297, 4
        %s299 = scalar_lea.vmem [#allocation8], %s298
        %p300 = pneg %p173
        %p301 = pneg %p170
        %s302 = sand.u32 %s160, 1
        %s303 = scalar_lea.sflag [#allocation10], %s302
        %s304 = sand.u32 %s160, 1
        %s305 = smul.addr %s304, 8
        %s306 = scalar_lea.vmem [#allocation9], %s305
        %s307 = smul.u32 2, %s33
        %s308 = smul.u32 2, %s33
        %s309 = smul.u32 2, %s33
        %s310 = smul.u32 2, %s33
        %s311 = smul.u32 2, %s33
        %v312 = vld [vmem:[%s259] sm:$0xff]
        %vm313 = vcmp.gt.f32.partialorder %v312, 0.0
        %v314 = vsel %vm313, %v312, -inf
        %v316 = vcombine.high %v314, %v314
        %v318 = vpack.c.bf16 %v314, %v314
        %v319 = vpack.c.bf16 %v316, %v316
        %v322 = vcombine.low %v318, %v319
        %v324 = vunpack.c.l.s4 1983009808
        %v325 = vunpack.c.0.s8 %v324
        %v326 = vlaneseq
        %v327 = vshrl.u32 %v326, 7
        %v328 = vsub.s32 %v325, %v327
        %v329 = vrot.slane %v322, %v328
        %331 = vst [vmem:[%s299] sm:$0xf] %v329
        %v332 = vld [vmem:[#allocation7] sm:$0xff]
        %v333 = vld [vmem:[%s268] sm:$0xff]
        %v335 = vrot.slane %v332, 6
        %v337 = vsub.f32 %v332, %v335
        %v338 = vadd.f32 %v337, 1.0
        %v339 = vmul.f32 %v338, 0.5
        %v341 = vrot.slane %v339, 6
        %v342 = vrot.slane %v341, 4
        %v344 = vadd.f32 %v332, %v342
        %v345 = vmul.f32 %v333, 0.1
        %v346 = vmul.f32 %v333, 0.2
        %v347 = vmin.f32 %v346, 4.1351666
        %v349 = vrot.slane %v338, 6
        %v350 = vrot.slane %v349, 4
        %v352 = vmul.f32 %v345, %v350
        %v353 = vadd.f32 %v352, %v344
        %v354 = vmul.f32 %v347, 1.442695
        %v355 = vpow.pop %v354
        %v356 = vmul.f32 %v355, %v338
        %v357 = vmul.f32 %v356, 0.5
        %v359 = vrot.slane %v357, 6
        %v360 = vrot.slane %v359, 4
        %v362 = vsub.f32 %v353, %v360
        %v363 = vadd.f32 %v353, %v360
        %v364 = vsub.f32 %v363, 1.0
        %v365 = vmax.f32 %v362, 0.0
        %v366 = vmin.f32 %v365, 63.0
        %v367 = vmax.f32 %v364, 0.0
        %v368 = vmin.f32 %v367, 63.0
        %369 = vst [vmem:[%s306] sm:$0x33] %v366
        %v371 = vrot.slane %v368, 6
        %373 = vst [vmem:[%s306] sm:$0xcc] %v371
        %s374 = sand.u32 %s132, 1
        %s375 = scalar_lea.sflag [#allocation4], %s374
        %s376 = sand.u32 %s132, 1
        %s377 = smul.addr %s376, 4
        %s378 = scalar_lea.vmem [#allocation8], %s377
        %s379 = sand.u32 %s160, 1
        %s380 = scalar_lea.sflag [#allocation10], %s379
        %s381 = sand.u32 %s160, 1
        %s382 = smul.addr %s381, 8
        %s383 = scalar_lea.vmem [#allocation9], %s382
        // Predicated region
        $region45: #{tpu_custom_call.1} parent=31 // pred_check
          %p384 = pneg %p142
        $region46: #{tpu_custom_call.1} parent=31 // pred_check_branch
          %386 = sbr.rel (%p384) target = $region48
        $region47: #{tpu_custom_call.1} parent=31 // pred_region
          %s387 = smul.u32 2, %s33
          %s389 = ssub.s32 64, 64
          %390 = vsyncadd %s375, %s389
          %s391 = smul.addr %s32, 2
          %s392 = sadd.s32 %s387, %s391
          %s393 = smul.addr %s392, 32
          %s394 = scalar_lea.hbm %s3, %s393
          %s396 = sshll.u32 %s378, 4
          %s397 = int_to_ptr.vmem [resolvable:$true] %s396
          %399 = dma.vmem_to_hbm [thread:$0]  %s397, 64, %s394, %s375
        $region48: #{tpu_custom_call.1} parent=31 // pred_fallthru
          _
        // Predicated region
        $region49: #{tpu_custom_call.1} parent=31 // pred_check
          %p400 = pneg %p170
        $region50: #{tpu_custom_call.1} parent=31 // pred_check_branch
          %402 = sbr.rel (%p400) target = $region52
        $region51: #{tpu_custom_call.1} parent=31 // pred_region
          %s403 = smul.u32 2, %s33
          %s405 = ssub.s32 128, 128
          %406 = vsyncadd %s380, %s405
          %s407 = smul.addr %s32, 2
          %s408 = sadd.s32 %s403, %s407
          %s409 = smul.addr %s408, 64
          %s410 = scalar_lea.hbm %s4, %s409
          %s412 = sshll.u32 %s383, 4
          %s413 = int_to_ptr.vmem [resolvable:$true] %s412
          %415 = dma.vmem_to_hbm [thread:$0]  %s413, 128, %s410, %s380
        $region52: #{tpu_custom_call.1} parent=31 // pred_fallthru
          _
      $region32: #{tpu_custom_call.1} parent=5 // pred_fallthru
        _
      %p416 = scmp.le.s32.totalorder 2, %s23
      // Predicated region
      $region53: #{tpu_custom_call.1} parent=5 // pred_check
        %p417 = pneg %p416
      $region54: #{tpu_custom_call.1} parent=5 // pred_check_branch
        %419 = sbr.rel (%p417) target = $region56
      $region55: #{tpu_custom_call.1} parent=5 // pred_region
        %s420 = ssub.s32 %s23, 2
        // Predicated region
        $region57: #{tpu_custom_call.1} parent=55 // pred_check
          %p421 = pneg %p148
        $region58: #{tpu_custom_call.1} parent=55 // pred_check_branch
          %423 = sbr.rel (%p421) target = $region60
        $region59: #{tpu_custom_call.1} parent=55 // pred_region
          %s424 = sand.u32 %s133, 1
          %s425 = scalar_lea.sflag [#allocation4], %s424
          %s426 = sand.u32 %s133, 1
          %s427 = smul.addr %s426, 4
          %s428 = scalar_lea.vmem [#allocation8], %s427
          %429 = dma.done %s425, 64
        $region60: #{tpu_custom_call.1} parent=55 // pred_fallthru
          _
        // Predicated region
        $region61: #{tpu_custom_call.1} parent=55 // pred_check
          %p430 = pneg %p176
        $region62: #{tpu_custom_call.1} parent=55 // pred_check_branch
          %432 = sbr.rel (%p430) target = $region64
        $region63: #{tpu_custom_call.1} parent=55 // pred_region
          %s433 = sand.u32 %s161, 1
          %s434 = scalar_lea.sflag [#allocation10], %s433
          %s435 = sand.u32 %s161, 1
          %s436 = smul.addr %s435, 8
          %s437 = scalar_lea.vmem [#allocation9], %s436
          %438 = dma.done %s434, 128
        $region64: #{tpu_custom_call.1} parent=55 // pred_fallthru
          _
      $region56: #{tpu_custom_call.1} parent=5 // pred_fallthru
        _
    $region6: #{tpu_custom_call.1} parent=1 // loop_footer
      %s27 = sadd.s32 1, %s23
    $region7: #{tpu_custom_call.1} parent=1 // loop_footer_branch
      %22 = sbr.rel target = $region3
    $region8: #{tpu_custom_call.1} parent=1 // loop_exit
      _
    %439 = vsyncpa [#allocation3], 1
    %s440 = scalar_lea.sflag [#allocation3], 1
    %441 = vsyncpa %s440, 1
    %442 = vsyncpa [#allocation6], 1
    %s443 = scalar_lea.sflag [#allocation6], 1
    %444 = vsyncpa %s443, 1
    %445 = vsyncpa [#allocation4], 1
    %s446 = scalar_lea.sflag [#allocation4], 1
    %447 = vsyncpa %s446, 1
    %448 = vsyncpa [#allocation10], 1
    %s449 = scalar_lea.sflag [#allocation10], 1
    %450 = vsyncpa %s449, 1

</llo_original>
